<compile_context>
chip_gen: v5e
topology: v5e:2x2
jax: 0.10.0
libtpu: 0.0.40
codegen_flags: <defaults>
</compile_context>

<pallas_src>
import jax
import jax.numpy as jnp
from jax import lax
from jax.experimental import pallas as pl
from jax.experimental.pallas import tpu as pltpu

LANE, SUB = 128, 8


def _round_up(n, m):
    return ((n + m - 1) // m) * m


def _make_kernel(eb, num_experts, d_out, d_out_pad):
    """Build the kernel with static expert-block size / padding info baked in."""
    inv_e = 1.0 / float(num_experts)
    need_mask = d_out_pad != d_out

    def kernel(x_ref, w1_ref, b1_ref, w2_ref, b2_ref, wf_ref, bf_ref, out_ref):
        e_blk = pl.program_id(1)             # expert-block (reduction) axis

        x = x_ref[...]                       # (tB, D_in_pad) bf16 MXU input

        if need_mask:
            col = lax.broadcasted_iota(jnp.int32, (1, d_out_pad), 1)
            pad_mask = col < d_out           # valid (un-padded) logit lanes

        # Sum of softmax outputs for the Eb experts handled in this grid step.
        p_sum = None
        for i in range(eb):                  # static unrolled expert loop
            h = jnp.dot(x, w1_ref[i],
                        preferred_element_type=jnp.float32) + b1_ref[i]
            h = jnp.maximum(h, 0.0)                                  # (tB, H_pad)
            y = jnp.dot(h.astype(jnp.bfloat16), w2_ref[i],
                        preferred_element_type=jnp.float32) + b2_ref[i]
            if need_mask:
                y = jnp.where(pad_mask, y, -1e30)   # keep pad lanes out of softmax
            m = jnp.max(y, axis=-1, keepdims=True)
            ey = jnp.exp(y - m)
            denom = jnp.sum(ey, axis=-1, keepdims=True)
            contrib = ey * pl.reciprocal(denom, approx=True)
            p_sum = contrib if p_sum is None else p_sum + contrib

        # Accumulate softmax outputs directly in the (VMEM-resident) output block.
        @pl.when(e_blk == 0)
        def _():
            out_ref[...] = p_sum             # overwrite-init: no zero pass

        @pl.when(e_blk > 0)
        def _():
            out_ref[...] = out_ref[...] + p_sum

        # Shared final Linear applied exactly once, on the mean over experts.
        @pl.when(e_blk == pl.num_programs(1) - 1)
        def _():
            mean_p = out_ref[...] * inv_e
            out_ref[...] = (jnp.dot(mean_p, wf_ref[...],
                                    preferred_element_type=jnp.float32)
                            + bf_ref[...])

    return kernel


def _pick_expert_block(E, d_in_p, h_p, d_out_p, cap, budget_bytes):
    """Largest divisor of E (<= cap) whose double-buffered bf16 weights fit budget."""
    per_expert = 2 * (d_in_p * h_p + h_p * d_out_p)      # bf16 bytes per expert
    for cand in range(min(E, cap), 0, -1):
        if E % cand == 0 and 2 * cand * per_expert <= budget_bytes:
            return cand
    return 1


def parallel_experts_forward(x, params, *, experts_per_block=2, batch_tile=None):
    """x: (B, D_in). Returns (mean-over-experts output (B, D_out), 0)."""
    w1, b1, w2, b2, wf, bf_ = (params["w1"], params["b1"], params["w2"],
                               params["b2"], params["wf"], params["bf"])
    E, D_in, H = w1.shape
    D_out = w2.shape[2]
    B = x.shape[0]

    d_in_p = _round_up(D_in, LANE)
    h_p = _round_up(H, LANE)
    d_out_p = _round_up(D_out, LANE)
    b_p = _round_up(B, SUB)

    # Experts per grid step: largest divisor of E <= experts_per_block whose
    # double-buffered weight blocks stay well inside scoped VMEM (~10 MiB budget).
    eb = _pick_expert_block(E, d_in_p, h_p, d_out_p,
                            cap=experts_per_block, budget_bytes=10 << 20)

    # Batch tile: largest multiple-of-8 divisor of the padded batch, capped at 256.
    if batch_tile is None:
        tb = min(b_p, 256)
        while b_p % tb:
            tb -= SUB
    else:
        tb = batch_tile
    assert b_p % tb == 0 and tb % SUB == 0

    f32, bf16 = jnp.float32, jnp.bfloat16
    # Pad to lane-dense shapes; everything feeding the MXU is streamed as bf16.
    xp = jnp.pad(x.astype(bf16), ((0, b_p - B), (0, d_in_p - D_in)))
    w1p = jnp.pad(w1.astype(bf16), ((0, 0), (0, d_in_p - D_in), (0, h_p - H)))
    b1p = jnp.pad(b1.astype(f32), ((0, 0), (0, 0), (0, h_p - H)))
    w2p = jnp.pad(w2.astype(bf16), ((0, 0), (0, h_p - H), (0, d_out_p - D_out)))
    b2p = jnp.pad(b2.astype(f32), ((0, 0), (0, 0), (0, d_out_p - D_out)))
    wfp = jnp.pad(wf.astype(f32), ((0, d_out_p - D_out), (0, d_out_p - D_out)))
    bfp = jnp.pad(bf_.astype(f32), ((0, 0), (0, d_out_p - D_out)))

    grid = (b_p // tb, E // eb)   # batch tiles (parallel) x expert blocks (reduction)

    grid_spec = pltpu.PrefetchScalarGridSpec(
        num_scalar_prefetch=0,
        grid=grid,
        in_specs=[
            pl.BlockSpec((tb, d_in_p), lambda b, e: (b, 0)),           # x tile
            pl.BlockSpec((eb, d_in_p, h_p), lambda b, e: (e, 0, 0)),   # W1 block
            pl.BlockSpec((eb, 1, h_p), lambda b, e: (e, 0, 0)),        # b1 block
            pl.BlockSpec((eb, h_p, d_out_p), lambda b, e: (e, 0, 0)),  # W2 block
            pl.BlockSpec((eb, 1, d_out_p), lambda b, e: (e, 0, 0)),    # b2 block
            pl.BlockSpec((d_out_p, d_out_p), lambda b, e: (0, 0)),     # final W
            pl.BlockSpec((1, d_out_p), lambda b, e: (0, 0)),           # final b
        ],
        out_specs=pl.BlockSpec((tb, d_out_p), lambda b, e: (b, 0)),
    )

    # Advisory cost estimate (padded shapes; weights re-streamed per batch tile).
    n_btiles = b_p // tb
    flops = 2 * b_p * E * (d_in_p * h_p + h_p * d_out_p) + 2 * b_p * d_out_p * d_out_p
    transcendentals = b_p * E * (d_out_p + 1)            # exp + softmax reciprocal
    bytes_accessed = (n_btiles * (E * (d_in_p * h_p + h_p * d_out_p) * 2
                                  + E * (h_p + d_out_p) * 4
                                  + d_out_p * d_out_p * 4 + d_out_p * 4)
                      + b_p * d_in_p * 2 + b_p * d_out_p * 4)

    out = pl.pallas_call(
        _make_kernel(eb, E, D_out, d_out_p),
        out_shape=jax.ShapeDtypeStruct((b_p, d_out_p), f32),
        grid_spec=grid_spec,
        compiler_params=pltpu.CompilerParams(
            dimension_semantics=("parallel", "arbitrary")),
        cost_estimate=pl.CostEstimate(flops=flops,
                                      transcendentals=transcendentals,
                                      bytes_accessed=bytes_accessed),
    )(xp, w1p, b1p, w2p, b2p, wfp, bfp)

    return out[:B, :D_out], 0


def init_params(key, input_size, output_size, num_experts, hidden_size):
    ks = jax.random.split(key, 6)
    s1 = 1.0 / (input_size ** 0.5)
    s2 = 1.0 / (hidden_size ** 0.5)
    sf = 1.0 / (output_size ** 0.5)
    # Expert weights pre-transposed to (E, D_in, H) / (E, H, D_out) so the kernel
    # computes x @ W directly (== torch's x @ W.T); stored in bf16 (MXU inputs).
    return {
        "w1": jax.random.uniform(ks[0], (num_experts, input_size, hidden_size),
                                 jnp.float32, -s1, s1).astype(jnp.bfloat16),
        "b1": jax.random.uniform(ks[1], (num_experts, 1, hidden_size),
                                 jnp.float32, -s1, s1),
        "w2": jax.random.uniform(ks[2], (num_experts, hidden_size, output_size),
                                 jnp.float32, -s2, s2).astype(jnp.bfloat16),
        "b2": jax.random.uniform(ks[3], (num_experts, 1, output_size),
                                 jnp.float32, -s2, s2),
        "wf": jax.random.uniform(ks[4], (output_size, output_size),
                                 jnp.float32, -sf, sf),
        "bf": jax.random.uniform(ks[5], (1, output_size),
                                 jnp.float32, -sf, sf),
    }


def reference_forward(x, params):
    """Pure-JAX reference mirroring the PyTorch module structure (per-expert final
    Linear then mean over experts) with the same bf16-matmul-input / f32-accumulate
    precision policy as the kernel."""
    f32, bf16 = jnp.float32, jnp.bfloat16
    w1, b1, w2, b2, wf, bf_ = (params["w1"], params["b1"], params["w2"],
                               params["b2"], params["wf"], params["bf"])
    xb = x.astype(bf16)
    outs = []
    for e in range(w1.shape[0]):
        h = jnp.dot(xb, w1[e].astype(bf16), preferred_element_type=f32) + b1[e]
        h = jnp.maximum(h, 0.0)
        y = jnp.dot(h.astype(bf16), w2[e].astype(bf16),
                    preferred_element_type=f32) + b2[e]
        p = jax.nn.softmax(y, axis=1)
        outs.append(jnp.dot(p, wf, preferred_element_type=f32) + bf_)
    return jnp.mean(jnp.stack(outs, axis=2), axis=-1)


if __name__ == "__main__":
    # Small shapes consistent with the module's forward: x is (batch, input_size).
    B, D_in, D_out, H, E = 8, 32, 32, 64, 4
    key = jax.random.PRNGKey(0)
    kx, kp = jax.random.split(key)
    x = jax.random.normal(kx, (B, D_in), dtype=jnp.float32)
    params = init_params(kp, D_in, D_out, E, H)

    out, aux = parallel_experts_forward(x, params)
    out = jax.block_until_ready(out)

    ref = reference_forward(x, params)
    assert out.shape == (B, D_out)
    assert aux == 0
    # Tolerance covers the approx (EUP) softmax reciprocal and the fp reordering
    # from hoisting the shared final Linear out of the expert loop.
    assert jnp.allclose(out, ref, atol=2e-3, rtol=2e-3), \
        float(jnp.max(jnp.abs(out - ref)))
    print("KERNEL_OK")
</pallas_src>

<mosaic_0001>
module attributes {stable_mosaic.version = 11 : i64} {
  func.func @kernel(%arg0: i32, %arg1: i32, %arg2: memref<8x128xbf16, #tpu.memory_space<vmem>>, %arg3: memref<2x128x128xbf16, #tpu.memory_space<vmem>>, %arg4: memref<2x1x128xf32, #tpu.memory_space<vmem>>, %arg5: memref<2x128x128xbf16, #tpu.memory_space<vmem>>, %arg6: memref<2x1x128xf32, #tpu.memory_space<vmem>>, %arg7: memref<128x128xf32, #tpu.memory_space<vmem>>, %arg8: memref<1x128xf32, #tpu.memory_space<vmem>>, %arg9: memref<8x128xf32, #tpu.memory_space<vmem>>) attributes {dimension_semantics = [#tpu.dimension_semantics<parallel>, #tpu.dimension_semantics<arbitrary>], iteration_bounds = array<i64: 1, 2>, scalar_prefetch = 0 : i64, scratch_operands = 0 : i64, tpu.core_type = #tpu.core_type<tc>, window_params = [{transform_indices = @transform_0, window_bounds = array<i64: 8, 128>}, {transform_indices = @transform_1, window_bounds = array<i64: 2, 128, 128>}, {transform_indices = @transform_2, window_bounds = array<i64: 2, 1, 128>}, {transform_indices = @transform_3, window_bounds = array<i64: 2, 128, 128>}, {transform_indices = @transform_4, window_bounds = array<i64: 2, 1, 128>}, {pipeline_mode = #tpu.pipeline_mode<synchronous>, transform_indices = @transform_5, window_bounds = array<i64: 128, 128>}, {pipeline_mode = #tpu.pipeline_mode<synchronous>, transform_indices = @transform_6, window_bounds = array<i64: 1, 128>}, {transform_indices = @transform_7, window_bounds = array<i64: 8, 128>}]} {
    %c0 = arith.constant 0 : index
    %c0_0 = arith.constant 0 : index
    %0 = vector.load %arg2[%c0, %c0_0] : memref<8x128xbf16, #tpu.memory_space<vmem>>, vector<8x128xbf16>
    %1 = tpu.iota {dimensions = array<i32: 1>} : vector<1x128xi32>
    %c32_i32 = arith.constant 32 : i32
    %2 = vector.broadcast %c32_i32 : i32 to vector<1x128xi32>
    %3 = arith.cmpi slt, %1, %2 : vector<1x128xi32>
    %c0_1 = arith.constant 0 : index
    %c0_2 = arith.constant 0 : index
    %c0_3 = arith.constant 0 : index
    %4 = vector.load %arg3[%c0_1, %c0_2, %c0_3] : memref<2x128x128xbf16, #tpu.memory_space<vmem>>, vector<1x128x128xbf16>
    %5 = vector.shape_cast %4 : vector<1x128x128xbf16> to vector<128x128xbf16>
    %cst = arith.constant dense<0.000000e+00> : vector<8x128xf32>
    %6 = tpu.matmul %0, %5, %cst {dimension_numbers = #tpu.dot_dimension_numbers<[1], [0], [0], [1], [0, 0, 1, 1], [], []>} : vector<8x128xbf16>, vector<128x128xbf16>, vector<8x128xf32> -> vector<8x128xf32>
    %c0_4 = arith.constant 0 : index
    %c0_5 = arith.constant 0 : index
    %c0_6 = arith.constant 0 : index
    %7 = vector.load %arg4[%c0_4, %c0_5, %c0_6] : memref<2x1x128xf32, #tpu.memory_space<vmem>>, vector<1x1x128xf32>
    %8 = vector.shape_cast %7 : vector<1x1x128xf32> to vector<1x128xf32>
    %9 = vector.broadcast %8 : vector<1x128xf32> to vector<8x128xf32>
    %10 = arith.addf %6, %9 : vector<8x128xf32>
    %cst_7 = arith.constant 0.000000e+00 : f32
    %11 = vector.broadcast %cst_7 : f32 to vector<8x128xf32>
    %12 = arith.maximumf %10, %11 : vector<8x128xf32>
    %13 = arith.truncf %12 : vector<8x128xf32> to vector<8x128xbf16>
    %c0_8 = arith.constant 0 : index
    %c0_9 = arith.constant 0 : index
    %c0_10 = arith.constant 0 : index
    %14 = vector.load %arg5[%c0_8, %c0_9, %c0_10] : memref<2x128x128xbf16, #tpu.memory_space<vmem>>, vector<1x128x128xbf16>
    %15 = vector.shape_cast %14 : vector<1x128x128xbf16> to vector<128x128xbf16>
    %cst_11 = arith.constant dense<0.000000e+00> : vector<8x128xf32>
    %16 = tpu.matmul %13, %15, %cst_11 {dimension_numbers = #tpu.dot_dimension_numbers<[1], [0], [0], [1], [0, 0, 1, 1], [], []>} : vector<8x128xbf16>, vector<128x128xbf16>, vector<8x128xf32> -> vector<8x128xf32>
    %c0_12 = arith.constant 0 : index
    %c0_13 = arith.constant 0 : index
    %c0_14 = arith.constant 0 : index
    %17 = vector.load %arg6[%c0_12, %c0_13, %c0_14] : memref<2x1x128xf32, #tpu.memory_space<vmem>>, vector<1x1x128xf32>
    %18 = vector.shape_cast %17 : vector<1x1x128xf32> to vector<1x128xf32>
    %19 = vector.broadcast %18 : vector<1x128xf32> to vector<8x128xf32>
    %20 = arith.addf %16, %19 : vector<8x128xf32>
    %cst_15 = arith.constant -1.000000e+30 : f32
    %21 = vector.shape_cast %3 : vector<1x128xi1> to vector<1x128xi1>
    %22 = vector.broadcast %21 : vector<1x128xi1> to vector<8x128xi1>
    %23 = vector.broadcast %cst_15 : f32 to vector<8x128xf32>
    %24 = arith.select %22, %20, %23 : vector<8x128xi1>, vector<8x128xf32>
    %cst_16 = arith.constant dense<0xFF800000> : vector<8xf32>
    %25 = vector.multi_reduction <maximumf>, %24, %cst_16 [1] : vector<8x128xf32> to vector<8xf32>
    %26 = vector.shape_cast %25 : vector<8xf32> to vector<8x1xf32>
    %27 = vector.broadcast %26 : vector<8x1xf32> to vector<8x128xf32>
    %28 = arith.subf %24, %27 : vector<8x128xf32>
    %29 = math.exp %28 : vector<8x128xf32>
    %cst_17 = arith.constant dense<0.000000e+00> : vector<8xf32>
    %30 = vector.multi_reduction <add>, %29, %cst_17 [1] : vector<8x128xf32> to vector<8xf32>
    %31 = vector.shape_cast %30 : vector<8xf32> to vector<8x1xf32>
    %32 = tpu.reciprocal %31 {approx = true} : vector<8x1xf32> -> vector<8x1xf32>
    %33 = vector.broadcast %32 : vector<8x1xf32> to vector<8x128xf32>
    %34 = arith.mulf %29, %33 : vector<8x128xf32>
    %c1 = arith.constant 1 : index
    %c0_18 = arith.constant 0 : index
    %c0_19 = arith.constant 0 : index
    %35 = vector.load %arg3[%c1, %c0_18, %c0_19] : memref<2x128x128xbf16, #tpu.memory_space<vmem>>, vector<1x128x128xbf16>
    %36 = vector.shape_cast %35 : vector<1x128x128xbf16> to vector<128x128xbf16>
    %cst_20 = arith.constant dense<0.000000e+00> : vector<8x128xf32>
    %37 = tpu.matmul %0, %36, %cst_20 {dimension_numbers = #tpu.dot_dimension_numbers<[1], [0], [0], [1], [0, 0, 1, 1], [], []>} : vector<8x128xbf16>, vector<128x128xbf16>, vector<8x128xf32> -> vector<8x128xf32>
    %c1_21 = arith.constant 1 : index
    %c0_22 = arith.constant 0 : index
    %c0_23 = arith.constant 0 : index
    %38 = vector.load %arg4[%c1_21, %c0_22, %c0_23] : memref<2x1x128xf32, #tpu.memory_space<vmem>>, vector<1x1x128xf32>
    %39 = vector.shape_cast %38 : vector<1x1x128xf32> to vector<1x128xf32>
    %40 = vector.broadcast %39 : vector<1x128xf32> to vector<8x128xf32>
    %41 = arith.addf %37, %40 : vector<8x128xf32>
    %cst_24 = arith.constant 0.000000e+00 : f32
    %42 = vector.broadcast %cst_24 : f32 to vector<8x128xf32>
    %43 = arith.maximumf %41, %42 : vector<8x128xf32>
    %44 = arith.truncf %43 : vector<8x128xf32> to vector<8x128xbf16>
    %c1_25 = arith.constant 1 : index
    %c0_26 = arith.constant 0 : index
    %c0_27 = arith.constant 0 : index
    %45 = vector.load %arg5[%c1_25, %c0_26, %c0_27] : memref<2x128x128xbf16, #tpu.memory_space<vmem>>, vector<1x128x128xbf16>
    %46 = vector.shape_cast %45 : vector<1x128x128xbf16> to vector<128x128xbf16>
    %cst_28 = arith.constant dense<0.000000e+00> : vector<8x128xf32>
    %47 = tpu.matmul %44, %46, %cst_28 {dimension_numbers = #tpu.dot_dimension_numbers<[1], [0], [0], [1], [0, 0, 1, 1], [], []>} : vector<8x128xbf16>, vector<128x128xbf16>, vector<8x128xf32> -> vector<8x128xf32>
    %c1_29 = arith.constant 1 : index
    %c0_30 = arith.constant 0 : index
    %c0_31 = arith.constant 0 : index
    %48 = vector.load %arg6[%c1_29, %c0_30, %c0_31] : memref<2x1x128xf32, #tpu.memory_space<vmem>>, vector<1x1x128xf32>
    %49 = vector.shape_cast %48 : vector<1x1x128xf32> to vector<1x128xf32>
    %50 = vector.broadcast %49 : vector<1x128xf32> to vector<8x128xf32>
    %51 = arith.addf %47, %50 : vector<8x128xf32>
    %cst_32 = arith.constant -1.000000e+30 : f32
    %52 = vector.shape_cast %3 : vector<1x128xi1> to vector<1x128xi1>
    %53 = vector.broadcast %52 : vector<1x128xi1> to vector<8x128xi1>
    %54 = vector.broadcast %cst_32 : f32 to vector<8x128xf32>
    %55 = arith.select %53, %51, %54 : vector<8x128xi1>, vector<8x128xf32>
    %cst_33 = arith.constant dense<0xFF800000> : vector<8xf32>
    %56 = vector.multi_reduction <maximumf>, %55, %cst_33 [1] : vector<8x128xf32> to vector<8xf32>
    %57 = vector.shape_cast %56 : vector<8xf32> to vector<8x1xf32>
    %58 = vector.broadcast %57 : vector<8x1xf32> to vector<8x128xf32>
    %59 = arith.subf %55, %58 : vector<8x128xf32>
    %60 = math.exp %59 : vector<8x128xf32>
    %cst_34 = arith.constant dense<0.000000e+00> : vector<8xf32>
    %61 = vector.multi_reduction <add>, %60, %cst_34 [1] : vector<8x128xf32> to vector<8xf32>
    %62 = vector.shape_cast %61 : vector<8xf32> to vector<8x1xf32>
    %63 = tpu.reciprocal %62 {approx = true} : vector<8x1xf32> -> vector<8x1xf32>
    %64 = vector.broadcast %63 : vector<8x1xf32> to vector<8x128xf32>
    %65 = arith.mulf %60, %64 : vector<8x128xf32>
    %66 = arith.addf %34, %65 : vector<8x128xf32>
    %c0_i32 = arith.constant 0 : i32
    %67 = arith.cmpi eq, %arg1, %c0_i32 : i32
    %68 = arith.extui %67 : i1 to i32
    %c0_i32_35 = arith.constant 0 : i32
    %69 = arith.cmpi ne, %68, %c0_i32_35 : i32
    scf.if %69 {
      %c0_39 = arith.constant 0 : index
      %c0_40 = arith.constant 0 : index
      %76 = vector.load %arg9[%c0_39, %c0_40] : memref<8x128xf32, #tpu.memory_space<vmem>>, vector<8x128xf32>
      tpu.vector_store %arg9[%c0_39, %c0_40], %66 {strides = array<i32>} : memref<8x128xf32, #tpu.memory_space<vmem>>, vector<8x128xf32>,
    } else {
    }
    %c0_i32_36 = arith.constant 0 : i32
    %70 = arith.cmpi sgt, %arg1, %c0_i32_36 : i32
    %71 = arith.extui %70 : i1 to i32
    %c0_i32_37 = arith.constant 0 : i32
    %72 = arith.cmpi ne, %71, %c0_i32_37 : i32
    scf.if %72 {
      %c0_39 = arith.constant 0 : index
      %c0_40 = arith.constant 0 : index
      %76 = vector.load %arg9[%c0_39, %c0_40] : memref<8x128xf32, #tpu.memory_space<vmem>>, vector<8x128xf32>
      %77 = arith.addf %76, %66 : vector<8x128xf32>
      %c0_41 = arith.constant 0 : index
      %c0_42 = arith.constant 0 : index
      %78 = vector.load %arg9[%c0_41, %c0_42] : memref<8x128xf32, #tpu.memory_space<vmem>>, vector<8x128xf32>
      tpu.vector_store %arg9[%c0_41, %c0_42], %77 {strides = array<i32>} : memref<8x128xf32, #tpu.memory_space<vmem>>, vector<8x128xf32>,
    } else {
    }
    %c1_i32 = arith.constant 1 : i32
    %73 = arith.cmpi eq, %arg1, %c1_i32 : i32
    %74 = arith.extui %73 : i1 to i32
    %c0_i32_38 = arith.constant 0 : i32
    %75 = arith.cmpi ne, %74, %c0_i32_38 : i32
    scf.if %75 {
      %c0_39 = arith.constant 0 : index
      %c0_40 = arith.constant 0 : index
      %76 = vector.load %arg9[%c0_39, %c0_40] : memref<8x128xf32, #tpu.memory_space<vmem>>, vector<8x128xf32>
      %cst_41 = arith.constant 2.500000e-01 : f32
      %77 = vector.broadcast %cst_41 : f32 to vector<8x128xf32>
      %78 = arith.mulf %76, %77 : vector<8x128xf32>
      %c0_42 = arith.constant 0 : index
      %c0_43 = arith.constant 0 : index
      %79 = vector.load %arg7[%c0_42, %c0_43] : memref<128x128xf32, #tpu.memory_space<vmem>>, vector<128x128xf32>
      %cst_44 = arith.constant dense<0.000000e+00> : vector<8x128xf32>
      %80 = tpu.matmul %78, %79, %cst_44 {dimension_numbers = #tpu.dot_dimension_numbers<[1], [0], [0], [1], [0, 0, 1, 1], [], []>} : vector<8x128xf32>, vector<128x128xf32>, vector<8x128xf32> -> vector<8x128xf32>
      %c0_45 = arith.constant 0 : index
      %c0_46 = arith.constant 0 : index
      %81 = vector.load %arg8[%c0_45, %c0_46] : memref<1x128xf32, #tpu.memory_space<vmem>>, vector<1x128xf32>
      %82 = vector.broadcast %81 : vector<1x128xf32> to vector<8x128xf32>
      %83 = arith.addf %80, %82 : vector<8x128xf32>
      %c0_47 = arith.constant 0 : index
      %c0_48 = arith.constant 0 : index
      %84 = vector.load %arg9[%c0_47, %c0_48] : memref<8x128xf32, #tpu.memory_space<vmem>>, vector<8x128xf32>
      tpu.vector_store %arg9[%c0_47, %c0_48], %83 {strides = array<i32>} : memref<8x128xf32, #tpu.memory_space<vmem>>, vector<8x128xf32>,
    } else {
    }
    return
  }
  func.func @transform_0(%arg0: i32, %arg1: i32) -> (i32, i32) {
    %c0_i32 = arith.constant 0 : i32
    %c0_i32_0 = arith.constant 0 : i32
    return %arg0, %c0_i32 : i32, i32
  }
  func.func @transform_1(%arg0: i32, %arg1: i32) -> (i32, i32, i32) {
    %c0_i32 = arith.constant 0 : i32
    %c0_i32_0 = arith.constant 0 : i32
    %c0_i32_1 = arith.constant 0 : i32
    return %arg1, %c0_i32, %c0_i32_0 : i32, i32, i32
  }
  func.func @transform_2(%arg0: i32, %arg1: i32) -> (i32, i32, i32) {
    %c0_i32 = arith.constant 0 : i32
    %c0_i32_0 = arith.constant 0 : i32
    %c0_i32_1 = arith.constant 0 : i32
    return %arg1, %c0_i32, %c0_i32_0 : i32, i32, i32
  }
  func.func @transform_3(%arg0: i32, %arg1: i32) -> (i32, i32, i32) {
    %c0_i32 = arith.constant 0 : i32
    %c0_i32_0 = arith.constant 0 : i32
    %c0_i32_1 = arith.constant 0 : i32
    return %arg1, %c0_i32, %c0_i32_0 : i32, i32, i32
  }
  func.func @transform_4(%arg0: i32, %arg1: i32) -> (i32, i32, i32) {
    %c0_i32 = arith.constant 0 : i32
    %c0_i32_0 = arith.constant 0 : i32
    %c0_i32_1 = arith.constant 0 : i32
    return %arg1, %c0_i32, %c0_i32_0 : i32, i32, i32
  }
  func.func @transform_5(%arg0: i32, %arg1: i32) -> (i32, i32) {
    %c0_i32 = arith.constant 0 : i32
    %c0_i32_0 = arith.constant 0 : i32
    %c0_i32_1 = arith.constant 0 : i32
    return %c0_i32, %c0_i32_0 : i32, i32
  }
  func.func @transform_6(%arg0: i32, %arg1: i32) -> (i32, i32) {
    %c0_i32 = arith.constant 0 : i32
    %c0_i32_0 = arith.constant 0 : i32
    %c0_i32_1 = arith.constant 0 : i32
    return %c0_i32, %c0_i32_0 : i32, i32
  }
  func.func @transform_7(%arg0: i32, %arg1: i32) -> (i32, i32) {
    %c0_i32 = arith.constant 0 : i32
    %c0_i32_0 = arith.constant 0 : i32
    return %arg0, %c0_i32 : i32, i32
  }
}

</mosaic_0001>

<llo_original>
// kernel: tpu_custom_call.1
$region0: #{tpu_custom_call.1}
  #allocation0 [shape = 'u32[]', space=smem, size = 0x4, offset = 0x4, fixed_abs, tag = 'smem constant byte address 0x4 - core index']
  #allocation1 [shape = 'u32[72,128]{1,0:T(1,128)}', space=vmem, size = 0x9000, scoped, tag = 'internal scratch']
  %s0 = inlined_call_operand.hbm [shape: bf16[8,128], index: 0, kind: input, shape index: {}]
  %s1 = inlined_call_operand.hbm [shape: bf16[4,128,128], index: 1, kind: input, shape index: {}]
  %s2 = inlined_call_operand.hbm [shape: f32[4,1,128], index: 2, kind: input, shape index: {}]
  %s3 = inlined_call_operand.hbm [shape: bf16[4,128,128], index: 3, kind: input, shape index: {}]
  %s4 = inlined_call_operand.hbm [shape: f32[4,1,128], index: 4, kind: input, shape index: {}]
  %s5 = inlined_call_operand.hbm [shape: f32[128,128], index: 5, kind: input, shape index: {}]
  %s6 = inlined_call_operand.vmem [shape: f32[1,128], index: 6, kind: input, shape index: {}]
  %s7 = inlined_call_operand.hbm [shape: f32[8,128], index: 7, kind: output, shape index: {}]
  %s8 = sld [smem:[#allocation0]]
  $region97: #{tpu_custom_call.1} parent=0
    _
  %s10 = ssub.s32 1, %s8
  %s11 = scalar_select 0, %s10, %s8
  $region1: #{tpu_custom_call.1} parent=0
    #allocation2 [shape = 'u8[2048]{0}', space=vmem, size = 0x800, scoped, tag = 'input window, operand 0, single buffered']
    #allocation3 [shape = 's32[2]{0}', space=sflag, size = 0x8, scoped, tag = 'scoped memory for tpu_custom_call.1']
    #allocation4 [shape = 's32[2]{0}', space=sflag, size = 0x8, scoped, tag = 'scoped memory for tpu_custom_call.1']
    #allocation5 [shape = 'u8[131072]{0}', space=vmem, size = 0x20000, scoped, tag = 'input window, operand 1']
    #allocation6 [shape = 's32[2]{0}', space=sflag, size = 0x8, scoped, tag = 'scoped memory for tpu_custom_call.1']
    #allocation7 [shape = 'u8[2048]{0}', space=vmem, size = 0x800, scoped, tag = 'input window, operand 2']
    #allocation8 [shape = 'u8[131072]{0}', space=vmem, size = 0x20000, scoped, tag = 'input window, operand 3']
    #allocation9 [shape = 's32[2]{0}', space=sflag, size = 0x8, scoped, tag = 'scoped memory for tpu_custom_call.1']
    #allocation10 [shape = 'u8[2048]{0}', space=vmem, size = 0x800, scoped, tag = 'input window, operand 4']
    #allocation11 [shape = 'u8[65536]{0}', space=vmem, size = 0x10000, scoped, tag = 'input window, operand 5, single buffered']
    #allocation12 [shape = 's32[1]{0}', space=sflag, size = 0x4, scoped, tag = 'scoped memory for tpu_custom_call.1']
    #allocation13 [shape = 'u8[4096]{0}', space=vmem, size = 0x1000, scoped, tag = 'output window, operand 0, single buffered']
    %12 = vsyncpa [#allocation3], 0
    %13 = vsyncpa [#allocation6], 0
    %s14 = scalar_lea.sflag [#allocation6], 1
    %15 = vsyncpa %s14, 0
    %16 = vsyncpa [#allocation9], 0
    %s17 = scalar_lea.sflag [#allocation9], 1
    %18 = vsyncpa %s17, 0
    %19 = vsyncpa [#allocation12], 0
    %20 = vsyncpa [#allocation4], 0
    loop: start=0, step=1, limit=4
    $region2: #{tpu_custom_call.1} parent=1 // loop_pre_header
      _
    $region3: #{tpu_custom_call.1} parent=1 // loop_header
      %s22 = sphi 0, %s26
      %p23 = scmp.ge.s32.totalorder %s22, 4
      %s29 = sphi 0, %s41
      %s30 = sphi 0, %s37
      %s31 = sphi 0, %s29
      %s32 = sphi 0, %s30
      %s33 = sphi 0, %s31
      %s34 = sphi 0, %s32
      %s44 = sphi 0, %s46
      %s47 = sphi 0, %s44
      %s48 = sphi 0, %s47
      %s64 = sphi 0, %s48
      %s70 = sphi 0, %s72
      %s73 = sphi 0, %s70
      %s74 = sphi 0, %s73
      %s90 = sphi 0, %s74
      %s96 = sphi 0, %s98
      %s99 = sphi 0, %s96
      %s100 = sphi 0, %s99
      %s116 = sphi 0, %s100
      %s122 = sphi 0, %s124
      %s125 = sphi 0, %s122
      %s126 = sphi 0, %s125
      %s142 = sphi 0, %s126
      %s148 = sphi 0, %s150
      %s151 = sphi 0, %s148
      %s152 = sphi 0, %s151
      %s168 = sphi 0, %s152
      %s172 = sphi 0, %s172
      %s174 = sphi 0, %s172
      %s175 = sphi 0, %s174
      %s189 = sphi 0, %s175
      %s193 = sphi 0, %s193
      %s195 = sphi 0, %s193
      %s196 = sphi 0, %s195
      %s210 = sphi 0, %s196
      %s216 = sphi 0, %s218
      %s219 = sphi 0, %s216
      %s220 = sphi 0, %s219
      %s236 = sphi 0, %s220
    $region4: #{tpu_custom_call.1} parent=1 // loop_header_branch
      %25 = sbr.rel (%p23) target = $region8
    $region5: #{tpu_custom_call.1} parent=1 // loop_body
      %s27 = ssub.s32 %s22, 1
      %s28 = ssub.s32 %s22, 2
      %s35 = sadd.s32 1, %s30
      %p36 = scmp.ge.s32.totalorder %s35, 2
      %s37 = scalar_select %p36, 0, %s35
      %s38 = sadd.s32 1, %s29
      %s39 = scalar_select %p36, %s38, %s29
      %p40 = scmp.ge.s32.totalorder %s39, 1
      %s41 = scalar_select %p40, 0, %s39
      %s42 = ssub.s32 %s29, %s41
      %p43 = scmp.eq.s32.totalorder %s42, 0
      %s45 = sadd.s32 %s44, 1
      %s46 = scalar_select %p43, %s44, %s45
      %p49 = pneg %p43
      %p50 = scmp.eq.s32.totalorder %s22, 1
      %p51 = por %p49, %p50
      %p52 = scmp.ne.s32.totalorder %s44, %s47
      %p53 = scmp.eq.s32.totalorder %s22, 0
      %p54 = por %p52, %p53
      %p55 = scmp.ne.s32.totalorder %s44, %s47
      %p56 = scmp.eq.s32.totalorder %s27, 1
      %p57 = por %p55, %p56
      %p58 = scmp.ne.s32.totalorder %s47, %s48
      %p59 = scmp.eq.s32.totalorder %s27, 0
      %p60 = por %p58, %p59
      %p61 = scmp.ne.s32.totalorder %s47, %s48
      %p62 = scmp.eq.s32.totalorder %s28, 1
      %p63 = por %p61, %p62
      %p65 = scmp.ne.s32.totalorder %s48, %s64
      %p66 = scmp.eq.s32.totalorder %s28, 0
      %p67 = por %p65, %p66
      %s68 = ssub.s32 %s30, %s37
      %p69 = scmp.eq.s32.totalorder %s68, 0
      %s71 = sadd.s32 %s70, 1
      %s72 = scalar_select %p69, %s70, %s71
      %p75 = pneg %p69
      %p76 = scmp.eq.s32.totalorder %s22, 1
      %p77 = por %p75, %p76
      %p78 = scmp.ne.s32.totalorder %s70, %s73
      %p79 = scmp.eq.s32.totalorder %s22, 0
      %p80 = por %p78, %p79
      %p81 = scmp.ne.s32.totalorder %s70, %s73
      %p82 = scmp.eq.s32.totalorder %s27, 1
      %p83 = por %p81, %p82
      %p84 = scmp.ne.s32.totalorder %s73, %s74
      %p85 = scmp.eq.s32.totalorder %s27, 0
      %p86 = por %p84, %p85
      %p87 = scmp.ne.s32.totalorder %s73, %s74
      %p88 = scmp.eq.s32.totalorder %s28, 1
      %p89 = por %p87, %p88
      %p91 = scmp.ne.s32.totalorder %s74, %s90
      %p92 = scmp.eq.s32.totalorder %s28, 0
      %p93 = por %p91, %p92
      %s94 = ssub.s32 %s30, %s37
      %p95 = scmp.eq.s32.totalorder %s94, 0
      %s97 = sadd.s32 %s96, 1
      %s98 = scalar_select %p95, %s96, %s97
      %p101 = pneg %p95
      %p102 = scmp.eq.s32.totalorder %s22, 1
      %p103 = por %p101, %p102
      %p104 = scmp.ne.s32.totalorder %s96, %s99
      %p105 = scmp.eq.s32.totalorder %s22, 0
      %p106 = por %p104, %p105
      %p107 = scmp.ne.s32.totalorder %s96, %s99
      %p108 = scmp.eq.s32.totalorder %s27, 1
      %p109 = por %p107, %p108
      %p110 = scmp.ne.s32.totalorder %s99, %s100
      %p111 = scmp.eq.s32.totalorder %s27, 0
      %p112 = por %p110, %p111
      %p113 = scmp.ne.s32.totalorder %s99, %s100
      %p114 = scmp.eq.s32.totalorder %s28, 1
      %p115 = por %p113, %p114
      %p117 = scmp.ne.s32.totalorder %s100, %s116
      %p118 = scmp.eq.s32.totalorder %s28, 0
      %p119 = por %p117, %p118
      %s120 = ssub.s32 %s30, %s37
      %p121 = scmp.eq.s32.totalorder %s120, 0
      %s123 = sadd.s32 %s122, 1
      %s124 = scalar_select %p121, %s122, %s123
      %p127 = pneg %p121
      %p128 = scmp.eq.s32.totalorder %s22, 1
      %p129 = por %p127, %p128
      %p130 = scmp.ne.s32.totalorder %s122, %s125
      %p131 = scmp.eq.s32.totalorder %s22, 0
      %p132 = por %p130, %p131
      %p133 = scmp.ne.s32.totalorder %s122, %s125
      %p134 = scmp.eq.s32.totalorder %s27, 1
      %p135 = por %p133, %p134
      %p136 = scmp.ne.s32.totalorder %s125, %s126
      %p137 = scmp.eq.s32.totalorder %s27, 0
      %p138 = por %p136, %p137
      %p139 = scmp.ne.s32.totalorder %s125, %s126
      %p140 = scmp.eq.s32.totalorder %s28, 1
      %p141 = por %p139, %p140
      %p143 = scmp.ne.s32.totalorder %s126, %s142
      %p144 = scmp.eq.s32.totalorder %s28, 0
      %p145 = por %p143, %p144
      %s146 = ssub.s32 %s30, %s37
      %p147 = scmp.eq.s32.totalorder %s146, 0
      %s149 = sadd.s32 %s148, 1
      %s150 = scalar_select %p147, %s148, %s149
      %p153 = pneg %p147
      %p154 = scmp.eq.s32.totalorder %s22, 1
      %p155 = por %p153, %p154
      %p156 = scmp.ne.s32.totalorder %s148, %s151
      %p157 = scmp.eq.s32.totalorder %s22, 0
      %p158 = por %p156, %p157
      %p159 = scmp.ne.s32.totalorder %s148, %s151
      %p160 = scmp.eq.s32.totalorder %s27, 1
      %p161 = por %p159, %p160
      %p162 = scmp.ne.s32.totalorder %s151, %s152
      %p163 = scmp.eq.s32.totalorder %s27, 0
      %p164 = por %p162, %p163
      %p165 = scmp.ne.s32.totalorder %s151, %s152
      %p166 = scmp.eq.s32.totalorder %s28, 1
      %p167 = por %p165, %p166
      %p169 = scmp.ne.s32.totalorder %s152, %s168
      %p170 = scmp.eq.s32.totalorder %s28, 0
      %p171 = por %p169, %p170
      %s173 = sadd.s32 %s172, 1
      %p176 = scmp.eq.s32.totalorder %s22, 1
      %p177 = scmp.ne.s32.totalorder %s172, %s174
      %p178 = scmp.eq.s32.totalorder %s22, 0
      %p179 = por %p177, %p178
      %p180 = scmp.ne.s32.totalorder %s172, %s174
      %p181 = scmp.eq.s32.totalorder %s27, 1
      %p182 = por %p180, %p181
      %p183 = scmp.ne.s32.totalorder %s174, %s175
      %p184 = scmp.eq.s32.totalorder %s27, 0
      %p185 = por %p183, %p184
      %p186 = scmp.ne.s32.totalorder %s174, %s175
      %p187 = scmp.eq.s32.totalorder %s28, 1
      %p188 = por %p186, %p187
      %p190 = scmp.ne.s32.totalorder %s175, %s189
      %p191 = scmp.eq.s32.totalorder %s28, 0
      %p192 = por %p190, %p191
      %s194 = sadd.s32 %s193, 1
      %p197 = scmp.eq.s32.totalorder %s22, 1
      %p198 = scmp.ne.s32.totalorder %s193, %s195
      %p199 = scmp.eq.s32.totalorder %s22, 0
      %p200 = por %p198, %p199
      %p201 = scmp.ne.s32.totalorder %s193, %s195
      %p202 = scmp.eq.s32.totalorder %s27, 1
      %p203 = por %p201, %p202
      %p204 = scmp.ne.s32.totalorder %s195, %s196
      %p205 = scmp.eq.s32.totalorder %s27, 0
      %p206 = por %p204, %p205
      %p207 = scmp.ne.s32.totalorder %s195, %s196
      %p208 = scmp.eq.s32.totalorder %s28, 1
      %p209 = por %p207, %p208
      %p211 = scmp.ne.s32.totalorder %s196, %s210
      %p212 = scmp.eq.s32.totalorder %s28, 0
      %p213 = por %p211, %p212
      %s214 = ssub.s32 %s29, %s41
      %p215 = scmp.eq.s32.totalorder %s214, 0
      %s217 = sadd.s32 %s216, 1
      %s218 = scalar_select %p215, %s216, %s217
      %p221 = pneg %p215
      %p222 = scmp.eq.s32.totalorder %s22, 1
      %p223 = por %p221, %p222
      %p224 = scmp.ne.s32.totalorder %s216, %s219
      %p225 = scmp.eq.s32.totalorder %s22, 0
      %p226 = por %p224, %p225
      %p227 = scmp.ne.s32.totalorder %s216, %s219
      %p228 = scmp.eq.s32.totalorder %s27, 1
      %p229 = por %p227, %p228
      %p230 = scmp.ne.s32.totalorder %s219, %s220
      %p231 = scmp.eq.s32.totalorder %s27, 0
      %p232 = por %p230, %p231
      %p233 = scmp.ne.s32.totalorder %s219, %s220
      %p234 = scmp.eq.s32.totalorder %s28, 1
      %p235 = por %p233, %p234
      %p237 = scmp.ne.s32.totalorder %s220, %s236
      %p238 = scmp.eq.s32.totalorder %s28, 0
      %p239 = por %p237, %p238
      %p240 = scmp.le.s32.totalorder 1, %s22
      %p241 = scmp.lt.s32.totalorder %s22, 3
      %p242 = pnand %p240, %p241
      %p243 = pneg %p242
      // Predicated region
      $region9: #{tpu_custom_call.1} parent=5 // pred_check
        _
      $region10: #{tpu_custom_call.1} parent=5 // pred_check_branch
        %245 = sbr.rel (%p242) target = $region12
      $region11: #{tpu_custom_call.1} parent=5 // pred_region
        %s246 = ssub.s32 %s22, 1
        // Predicated region
        $region13: #{tpu_custom_call.1} parent=11 // pred_check
          %p247 = pneg %p60
        $region14: #{tpu_custom_call.1} parent=11 // pred_check_branch
          %249 = sbr.rel (%p247) target = $region16
        $region15: #{tpu_custom_call.1} parent=11 // pred_region
          %251 = vsyncadd [#allocation3], 0
          %s252 = smul.addr %s31, 4
          %s253 = scalar_lea.hbm %s0, %s252
          %s255 = sshll.u32 %s253, 4
          %s256 = int_to_ptr.hbm [resolvable:$true] %s255
          %s257 = sshll.u32 [#allocation2], 4
          %s258 = int_to_ptr.vmem [resolvable:$true] %s257
          %260 = dma.hbm_to_vmem [thread:$0]  %s256, 64, %s258, [#allocation3]
        $region16: #{tpu_custom_call.1} parent=11 // pred_fallthru
          _
        // Predicated region
        $region17: #{tpu_custom_call.1} parent=11 // pred_check
          %p261 = pneg %p185
        $region18: #{tpu_custom_call.1} parent=11 // pred_check_branch
          %263 = sbr.rel (%p261) target = $region20
        $region19: #{tpu_custom_call.1} parent=11 // pred_region
          %265 = vsyncadd [#allocation12], 0
          %s266 = sshll.u32 %s5, 4
          %s267 = int_to_ptr.hbm [resolvable:$true] %s266
          %s268 = sshll.u32 [#allocation11], 4
          %s269 = int_to_ptr.vmem [resolvable:$true] %s268
          %274 = dma.hbm_to_vmem [thread:$0]  %s267, 2048, %s269, [#allocation12], 128, 128, 8
        $region20: #{tpu_custom_call.1} parent=11 // pred_fallthru
          _
        // Predicated region
        $region21: #{tpu_custom_call.1} parent=11 // pred_check
          %p275 = pneg %p206
        $region22: #{tpu_custom_call.1} parent=11 // pred_check_branch
          %277 = sbr.rel (%p275) target = $region24
        $region23: #{tpu_custom_call.1} parent=11 // pred_region
          _
        $region24: #{tpu_custom_call.1} parent=11 // pred_fallthru
          _
      $region12: #{tpu_custom_call.1} parent=5 // pred_fallthru
        _
      %p278 = scmp.lt.s32.totalorder %s22, 2
      // Predicated region
      $region25: #{tpu_custom_call.1} parent=5 // pred_check
        %p279 = pneg %p278
      $region26: #{tpu_custom_call.1} parent=5 // pred_check_branch
        %281 = sbr.rel (%p279) target = $region28
      $region27: #{tpu_custom_call.1} parent=5 // pred_region
        // Predicated region
        $region29: #{tpu_custom_call.1} parent=27 // pred_check
          %p282 = pneg %p80
        $region30: #{tpu_custom_call.1} parent=27 // pred_check_branch
          %284 = sbr.rel (%p282) target = $region32
        $region31: #{tpu_custom_call.1} parent=27 // pred_region
          %s285 = sand.u32 %s22, 1
          %s286 = scalar_lea.sflag [#allocation6], %s285
          %s287 = sand.u32 %s70, 1
          %s288 = smul.addr %s287, 128
          %s289 = scalar_lea.vmem [#allocation5], %s288
          %s290 = smul.u32 2, %s30
          %292 = vsyncadd %s286, 0
          %s293 = smul.addr %s290, 16
          %s294 = smul.addr %s293, 4
          %s295 = scalar_lea.hbm %s1, %s294
          %s296 = sshll.u32 %s295, 4
          %s297 = int_to_ptr.hbm [resolvable:$true] %s296
          %s298 = sshll.u32 %s289, 4
          %s299 = int_to_ptr.vmem [resolvable:$true] %s298
          %304 = dma.hbm_to_vmem [thread:$0]  %s297, 2048, %s299, %s286, 64, 64, 4
        $region32: #{tpu_custom_call.1} parent=27 // pred_fallthru
          _
        // Predicated region
        $region33: #{tpu_custom_call.1} parent=27 // pred_check
          %p305 = pneg %p106
        $region34: #{tpu_custom_call.1} parent=27 // pred_check_branch
          %307 = sbr.rel (%p305) target = $region36
        $region35: #{tpu_custom_call.1} parent=27 // pred_region
          %s308 = sand.u32 %s22, 1
          %s309 = scalar_lea.sflag [#allocation6], %s308
          %s310 = sand.u32 %s96, 1
          %s311 = smul.addr %s310, 2
          %s312 = scalar_lea.vmem [#allocation7], %s311
          %s313 = smul.u32 2, %s30
          %315 = vsyncadd %s309, 0
          %s316 = scalar_lea.hbm %s2, %s313
          %s317 = sshll.u32 %s316, 4
          %s318 = int_to_ptr.hbm [resolvable:$true] %s317
          %s319 = sshll.u32 %s312, 4
          %s320 = int_to_ptr.vmem [resolvable:$true] %s319
          %325 = dma.hbm_to_vmem [thread:$0]  %s318, 32, %s320, %s309, 16, 16, 1
        $region36: #{tpu_custom_call.1} parent=27 // pred_fallthru
          _
        // Predicated region
        $region37: #{tpu_custom_call.1} parent=27 // pred_check
          %p326 = pneg %p132
        $region38: #{tpu_custom_call.1} parent=27 // pred_check_branch
          %328 = sbr.rel (%p326) target = $region40
        $region39: #{tpu_custom_call.1} parent=27 // pred_region
          %s329 = sand.u32 %s22, 1
          %s330 = scalar_lea.sflag [#allocation9], %s329
          %s331 = sand.u32 %s122, 1
          %s332 = smul.addr %s331, 128
          %s333 = scalar_lea.vmem [#allocation8], %s332
          %s334 = smul.u32 2, %s30
          %336 = vsyncadd %s330, 0
          %s337 = smul.addr %s334, 16
          %s338 = smul.addr %s337, 4
          %s339 = scalar_lea.hbm %s3, %s338
          %s340 = sshll.u32 %s339, 4
          %s341 = int_to_ptr.hbm [resolvable:$true] %s340
          %s342 = sshll.u32 %s333, 4
          %s343 = int_to_ptr.vmem [resolvable:$true] %s342
          %348 = dma.hbm_to_vmem [thread:$0]  %s341, 2048, %s343, %s330, 64, 64, 4
        $region40: #{tpu_custom_call.1} parent=27 // pred_fallthru
          _
        // Predicated region
        $region41: #{tpu_custom_call.1} parent=27 // pred_check
          %p349 = pneg %p158
        $region42: #{tpu_custom_call.1} parent=27 // pred_check_branch
          %351 = sbr.rel (%p349) target = $region44
        $region43: #{tpu_custom_call.1} parent=27 // pred_region
          %s352 = sand.u32 %s22, 1
          %s353 = scalar_lea.sflag [#allocation9], %s352
          %s354 = sand.u32 %s148, 1
          %s355 = smul.addr %s354, 2
          %s356 = scalar_lea.vmem [#allocation10], %s355
          %s357 = smul.u32 2, %s30
          %359 = vsyncadd %s353, 0
          %s360 = scalar_lea.hbm %s4, %s357
          %s361 = sshll.u32 %s360, 4
          %s362 = int_to_ptr.hbm [resolvable:$true] %s361
          %s363 = sshll.u32 %s356, 4
          %s364 = int_to_ptr.vmem [resolvable:$true] %s363
          %369 = dma.hbm_to_vmem [thread:$0]  %s362, 32, %s364, %s353, 16, 16, 1
        $region44: #{tpu_custom_call.1} parent=27 // pred_fallthru
          _
      $region28: #{tpu_custom_call.1} parent=5 // pred_fallthru
        _
      %p370 = scmp.le.s32.totalorder 1, %s22
      %p371 = scmp.lt.s32.totalorder %s22, 3
      %p372 = pnand %p370, %p371
      %p373 = pneg %p372
      // Predicated region
      $region45: #{tpu_custom_call.1} parent=5 // pred_check
        _
      $region46: #{tpu_custom_call.1} parent=5 // pred_check_branch
        %375 = sbr.rel (%p372) target = $region48
      $region47: #{tpu_custom_call.1} parent=5 // pred_region
        %s376 = ssub.s32 %s22, 1
        // Predicated region
        $region49: #{tpu_custom_call.1} parent=47 // pred_check
          %p377 = pneg %p60
        $region50: #{tpu_custom_call.1} parent=47 // pred_check_branch
          %379 = sbr.rel (%p377) target = $region52
        $region51: #{tpu_custom_call.1} parent=47 // pred_region
          %381 = dma.done [#allocation3], 64
        $region52: #{tpu_custom_call.1} parent=47 // pred_fallthru
          _
        %s382 = sand.u32 %s27, 1
        %s383 = scalar_lea.sflag [#allocation6], %s382
        %s384 = sand.u32 %s73, 1
        %s385 = smul.addr %s384, 128
        %s386 = scalar_lea.vmem [#allocation5], %s385
        // Predicated region
        $region53: #{tpu_custom_call.1} parent=47 // pred_check
          %p387 = pneg %p86
        $region54: #{tpu_custom_call.1} parent=47 // pred_check_branch
          %389 = sbr.rel (%p387) target = $region56
        $region55: #{tpu_custom_call.1} parent=47 // pred_region
          %391 = dma.done %s383, 2048
        $region56: #{tpu_custom_call.1} parent=47 // pred_fallthru
          _
        %s392 = sand.u32 %s27, 1
        %s393 = scalar_lea.sflag [#allocation6], %s392
        %s394 = sand.u32 %s99, 1
        %s395 = smul.addr %s394, 2
        %s396 = scalar_lea.vmem [#allocation7], %s395
        // Predicated region
        $region57: #{tpu_custom_call.1} parent=47 // pred_check
          %p397 = pneg %p112
        $region58: #{tpu_custom_call.1} parent=47 // pred_check_branch
          %399 = sbr.rel (%p397) target = $region60
        $region59: #{tpu_custom_call.1} parent=47 // pred_region
          %401 = dma.done %s393, 32
        $region60: #{tpu_custom_call.1} parent=47 // pred_fallthru
          _
        %s402 = sand.u32 %s27, 1
        %s403 = scalar_lea.sflag [#allocation9], %s402
        %s404 = sand.u32 %s125, 1
        %s405 = smul.addr %s404, 128
        %s406 = scalar_lea.vmem [#allocation8], %s405
        // Predicated region
        $region61: #{tpu_custom_call.1} parent=47 // pred_check
          %p407 = pneg %p138
        $region62: #{tpu_custom_call.1} parent=47 // pred_check_branch
          %409 = sbr.rel (%p407) target = $region64
        $region63: #{tpu_custom_call.1} parent=47 // pred_region
          %411 = dma.done %s403, 2048
        $region64: #{tpu_custom_call.1} parent=47 // pred_fallthru
          _
        %s412 = sand.u32 %s27, 1
        %s413 = scalar_lea.sflag [#allocation9], %s412
        %s414 = sand.u32 %s151, 1
        %s415 = smul.addr %s414, 2
        %s416 = scalar_lea.vmem [#allocation10], %s415
        // Predicated region
        $region65: #{tpu_custom_call.1} parent=47 // pred_check
          %p417 = pneg %p164
        $region66: #{tpu_custom_call.1} parent=47 // pred_check_branch
          %419 = sbr.rel (%p417) target = $region68
        $region67: #{tpu_custom_call.1} parent=47 // pred_region
          %421 = dma.done %s413, 32
        $region68: #{tpu_custom_call.1} parent=47 // pred_fallthru
          _
        // Predicated region
        $region69: #{tpu_custom_call.1} parent=47 // pred_check
          %p422 = pneg %p185
        $region70: #{tpu_custom_call.1} parent=47 // pred_check_branch
          %424 = sbr.rel (%p422) target = $region72
        $region71: #{tpu_custom_call.1} parent=47 // pred_region
          %426 = dma.done [#allocation12], 2048
        $region72: #{tpu_custom_call.1} parent=47 // pred_fallthru
          _
        %p427 = pneg %p60
        %p428 = pneg %p57
        %s429 = sand.u32 %s27, 1
        %s430 = scalar_lea.sflag [#allocation6], %s429
        %s431 = sand.u32 %s73, 1
        %s432 = smul.addr %s431, 128
        %s433 = scalar_lea.vmem [#allocation5], %s432
        %p434 = pneg %p86
        %p435 = pneg %p83
        %s436 = sand.u32 %s27, 1
        %s437 = scalar_lea.sflag [#allocation6], %s436
        %s438 = sand.u32 %s99, 1
        %s439 = smul.addr %s438, 2
        %s440 = scalar_lea.vmem [#allocation7], %s439
        %p441 = pneg %p112
        %p442 = pneg %p109
        %s443 = sand.u32 %s27, 1
        %s444 = scalar_lea.sflag [#allocation9], %s443
        %s445 = sand.u32 %s125, 1
        %s446 = smul.addr %s445, 128
        %s447 = scalar_lea.vmem [#allocation8], %s446
        %p448 = pneg %p138
        %p449 = pneg %p135
        %s450 = sand.u32 %s27, 1
        %s451 = scalar_lea.sflag [#allocation9], %s450
        %s452 = sand.u32 %s151, 1
        %s453 = smul.addr %s452, 2
        %s454 = scalar_lea.vmem [#allocation10], %s453
        %p455 = pneg %p164
        %p456 = pneg %p161
        %p457 = pneg %p185
        %p458 = pneg %p182
        %p459 = pneg %p206
        %p460 = pneg %p203
        %p461 = pneg %p232
        %p462 = pneg %p229
        %s463 = smul.u32 2, %s32
        %s464 = smul.u32 2, %s32
        %s465 = smul.u32 2, %s32
        %s466 = smul.u32 2, %s32
        %v467 = vld [vmem:[#allocation2] sm:$0xf]
        %v468 = vlaneseq
        %v469 = vand.u32 %v468, 127
        %vm470 = vcmp.lt.s32.totalorder %v469, 32
        %v471 = vld [vmem:[%s386] sm:$0xf]
        %v472 = vld [vmem:[%s386 + $0x4] sm:$0xf]
        %v473 = vld [vmem:[%s386 + $0x8] sm:$0xf]
        %v474 = vld [vmem:[%s386 + $0xc] sm:$0xf]
        %v475 = vld [vmem:[%s386 + $0x10] sm:$0xf]
        %v476 = vld [vmem:[%s386 + $0x14] sm:$0xf]
        %v477 = vld [vmem:[%s386 + $0x18] sm:$0xf]
        %v478 = vld [vmem:[%s386 + $0x1c] sm:$0xf]
        %v479 = vld [vmem:[%s386 + $0x20] sm:$0xf]
        %v480 = vld [vmem:[%s386 + $0x24] sm:$0xf]
        %v481 = vld [vmem:[%s386 + $0x28] sm:$0xf]
        %v482 = vld [vmem:[%s386 + $0x2c] sm:$0xf]
        %v483 = vld [vmem:[%s386 + $0x30] sm:$0xf]
        %v484 = vld [vmem:[%s386 + $0x34] sm:$0xf]
        %v485 = vld [vmem:[%s386 + $0x38] sm:$0xf]
        %v486 = vld [vmem:[%s386 + $0x3c] sm:$0xf]
        %v487 = vld [vmem:[%s396] sm:$0x1]
        %v489 = vperm.slane %v487, 0
        %v507 = vunpack.c.l.b16 %v471
        %v508 = vunpack.c.l.b16 %v472
        %v509 = vunpack.c.l.b16 %v473
        %v510 = vunpack.c.l.b16 %v474
        %v511 = vunpack.c.l.b16 %v475
        %v512 = vunpack.c.l.b16 %v476
        %v513 = vunpack.c.l.b16 %v477
        %v514 = vunpack.c.l.b16 %v478
        %v515 = vunpack.c.l.b16 %v479
        %v516 = vunpack.c.l.b16 %v480
        %v517 = vunpack.c.l.b16 %v481
        %v518 = vunpack.c.l.b16 %v482
        %v519 = vunpack.c.l.b16 %v483
        %v520 = vunpack.c.l.b16 %v484
        %v521 = vunpack.c.l.b16 %v485
        %v522 = vunpack.c.l.b16 %v486
        %v523 = vpack.c.b16 %v508, %v507
        %v524 = vpack.c.b16 %v510, %v509
        %v525 = vpack.c.b16 %v512, %v511
        %v526 = vpack.c.b16 %v514, %v513
        %v527 = vpack.c.b16 %v516, %v515
        %v528 = vpack.c.b16 %v518, %v517
        %v529 = vpack.c.b16 %v520, %v519
        %v530 = vpack.c.b16 %v522, %v521
        %539 = vmatpush.bf16.msra.mxu0 %v530
        %540 = vmatpush.bf16.msra.mxu0 %v529
        %541 = vmatpush.bf16.msra.mxu0 %v528
        %542 = vmatpush.bf16.msra.mxu0 %v527
        %543 = vmatpush.bf16.msra.mxu0 %v526
        %544 = vmatpush.bf16.msra.mxu0 %v525
        %545 = vmatpush.bf16.msra.mxu0 %v524
        %546 = vmatpush.bf16.msra.mxu0 %v523
        %547 = vmatmul.bf16.gmra.mxu0 %v467
        %v548 = vpop.f32.mrf.mxu0
        %v549 = vadd.f32 %v489, %v548
        %v550 = vpop.f32.mrf.mxu0
        %551 = vdwg.mxu0
        %v552 = vmax.f32 %v549, 0.0
        %v553 = vpack.c.bf16 %v552, %v552
        %v554 = vld [vmem:[%s406] sm:$0xf]
        %v555 = vld [vmem:[%s406 + $0x4] sm:$0xf]
        %v556 = vld [vmem:[%s406 + $0x8] sm:$0xf]
        %v557 = vld [vmem:[%s406 + $0xc] sm:$0xf]
        %v558 = vld [vmem:[%s406 + $0x10] sm:$0xf]
        %v559 = vld [vmem:[%s406 + $0x14] sm:$0xf]
        %v560 = vld [vmem:[%s406 + $0x18] sm:$0xf]
        %v561 = vld [vmem:[%s406 + $0x1c] sm:$0xf]
        %v562 = vld [vmem:[%s406 + $0x20] sm:$0xf]
        %v563 = vld [vmem:[%s406 + $0x24] sm:$0xf]
        %v564 = vld [vmem:[%s406 + $0x28] sm:$0xf]
        %v565 = vld [vmem:[%s406 + $0x2c] sm:$0xf]
        %v566 = vld [vmem:[%s406 + $0x30] sm:$0xf]
        %v567 = vld [vmem:[%s406 + $0x34] sm:$0xf]
        %v568 = vld [vmem:[%s406 + $0x38] sm:$0xf]
        %v569 = vld [vmem:[%s406 + $0x3c] sm:$0xf]
        %v570 = vld [vmem:[%s416] sm:$0x1]
        %v572 = vperm.slane %v570, 0
        %v590 = vunpack.c.l.b16 %v554
        %v591 = vunpack.c.l.b16 %v555
        %v592 = vunpack.c.l.b16 %v556
        %v593 = vunpack.c.l.b16 %v557
        %v594 = vunpack.c.l.b16 %v558
        %v595 = vunpack.c.l.b16 %v559
        %v596 = vunpack.c.l.b16 %v560
        %v597 = vunpack.c.l.b16 %v561
        %v598 = vunpack.c.l.b16 %v562
        %v599 = vunpack.c.l.b16 %v563
        %v600 = vunpack.c.l.b16 %v564
        %v601 = vunpack.c.l.b16 %v565
        %v602 = vunpack.c.l.b16 %v566
        %v603 = vunpack.c.l.b16 %v567
        %v604 = vunpack.c.l.b16 %v568
        %v605 = vunpack.c.l.b16 %v569
        %v606 = vpack.c.b16 %v591, %v590
        %v607 = vpack.c.b16 %v593, %v592
        %v608 = vpack.c.b16 %v595, %v594
        %v609 = vpack.c.b16 %v597, %v596
        %v610 = vpack.c.b16 %v599, %v598
        %v611 = vpack.c.b16 %v601, %v600
        %v612 = vpack.c.b16 %v603, %v602
        %v613 = vpack.c.b16 %v605, %v604
        %622 = vmatpush.bf16.msra.mxu0 %v613
        %623 = vmatpush.bf16.msra.mxu0 %v612
        %624 = vmatpush.bf16.msra.mxu0 %v611
        %625 = vmatpush.bf16.msra.mxu0 %v610
        %626 = vmatpush.bf16.msra.mxu0 %v609
        %627 = vmatpush.bf16.msra.mxu0 %v608
        %628 = vmatpush.bf16.msra.mxu0 %v607
        %629 = vmatpush.bf16.msra.mxu0 %v606
        %630 = vmatmul.bf16.gmra.mxu0 %v553
        %v631 = vpop.f32.mrf.mxu0
        %v632 = vadd.f32 %v572, %v631
        %v633 = vpop.f32.mrf.mxu0
        %634 = vdwg.mxu0
        %v635 = vsel %vm470, 1, 0
        %vm636 = vcmp.eq.s32.totalorder %v635, 1
        %v637 = vsel %vm636, %v632, -1e+30
        %638 = vmax.xlane.f32.xlu0 %v637
        %v639 = vpop.xlane.xlu0 %638
        %v640 = vsub.f32 %v637, %v639
        %v641 = vmul.f32 %v640, 1.442695
        %v642 = vpow.pop %v641
        %643 = vadd.xlane.f32.xlu0 %v642
        %v644 = vpop.xlane.xlu0 %643
        %v645 = vrcp.pop %v644
        %v646 = vmul.f32 %v642, %v645
        %s647 = scalar_lea.vmem %s386, 64 [#allocation5]
        %v648 = vld [vmem:[%s647] sm:$0xf]
        %v649 = vld [vmem:[%s647 + $0x4] sm:$0xf]
        %v650 = vld [vmem:[%s647 + $0x8] sm:$0xf]
        %v651 = vld [vmem:[%s647 + $0xc] sm:$0xf]
        %v652 = vld [vmem:[%s647 + $0x10] sm:$0xf]
        %v653 = vld [vmem:[%s647 + $0x14] sm:$0xf]
        %v654 = vld [vmem:[%s647 + $0x18] sm:$0xf]
        %v655 = vld [vmem:[%s647 + $0x1c] sm:$0xf]
        %v656 = vld [vmem:[%s647 + $0x20] sm:$0xf]
        %v657 = vld [vmem:[%s647 + $0x24] sm:$0xf]
        %v658 = vld [vmem:[%s647 + $0x28] sm:$0xf]
        %v659 = vld [vmem:[%s647 + $0x2c] sm:$0xf]
        %v660 = vld [vmem:[%s647 + $0x30] sm:$0xf]
        %v661 = vld [vmem:[%s647 + $0x34] sm:$0xf]
        %v662 = vld [vmem:[%s647 + $0x38] sm:$0xf]
        %v663 = vld [vmem:[%s647 + $0x3c] sm:$0xf]
        %s664 = scalar_lea.vmem %s396, 1 [#allocation7]
        %v665 = vld [vmem:[%s664] sm:$0x1]
        %v667 = vperm.slane %v665, 0
        %v685 = vunpack.c.l.b16 %v648
        %v686 = vunpack.c.l.b16 %v649
        %v687 = vunpack.c.l.b16 %v650
        %v688 = vunpack.c.l.b16 %v651
        %v689 = vunpack.c.l.b16 %v652
        %v690 = vunpack.c.l.b16 %v653
        %v691 = vunpack.c.l.b16 %v654
        %v692 = vunpack.c.l.b16 %v655
        %v693 = vunpack.c.l.b16 %v656
        %v694 = vunpack.c.l.b16 %v657
        %v695 = vunpack.c.l.b16 %v658
        %v696 = vunpack.c.l.b16 %v659
        %v697 = vunpack.c.l.b16 %v660
        %v698 = vunpack.c.l.b16 %v661
        %v699 = vunpack.c.l.b16 %v662
        %v700 = vunpack.c.l.b16 %v663
        %v701 = vpack.c.b16 %v686, %v685
        %v702 = vpack.c.b16 %v688, %v687
        %v703 = vpack.c.b16 %v690, %v689
        %v704 = vpack.c.b16 %v692, %v691
        %v705 = vpack.c.b16 %v694, %v693
        %v706 = vpack.c.b16 %v696, %v695
        %v707 = vpack.c.b16 %v698, %v697
        %v708 = vpack.c.b16 %v700, %v699
        %717 = vmatpush.bf16.msra.mxu0 %v708
        %718 = vmatpush.bf16.msra.mxu0 %v707
        %719 = vmatpush.bf16.msra.mxu0 %v706
        %720 = vmatpush.bf16.msra.mxu0 %v705
        %721 = vmatpush.bf16.msra.mxu0 %v704
        %722 = vmatpush.bf16.msra.mxu0 %v703
        %723 = vmatpush.bf16.msra.mxu0 %v702
        %724 = vmatpush.bf16.msra.mxu0 %v701
        %725 = vmatmul.bf16.gmra.mxu0 %v467
        %v726 = vpop.f32.mrf.mxu0
        %v727 = vadd.f32 %v667, %v726
        %v728 = vpop.f32.mrf.mxu0
        %729 = vdwg.mxu0
        %v730 = vmax.f32 %v727, 0.0
        %v731 = vpack.c.bf16 %v730, %v730
        %s732 = scalar_lea.vmem %s406, 64 [#allocation8]
        %v733 = vld [vmem:[%s732] sm:$0xf]
        %v734 = vld [vmem:[%s732 + $0x4] sm:$0xf]
        %v735 = vld [vmem:[%s732 + $0x8] sm:$0xf]
        %v736 = vld [vmem:[%s732 + $0xc] sm:$0xf]
        %v737 = vld [vmem:[%s732 + $0x10] sm:$0xf]
        %v738 = vld [vmem:[%s732 + $0x14] sm:$0xf]
        %v739 = vld [vmem:[%s732 + $0x18] sm:$0xf]
        %v740 = vld [vmem:[%s732 + $0x1c] sm:$0xf]
        %v741 = vld [vmem:[%s732 + $0x20] sm:$0xf]
        %v742 = vld [vmem:[%s732 + $0x24] sm:$0xf]
        %v743 = vld [vmem:[%s732 + $0x28] sm:$0xf]
        %v744 = vld [vmem:[%s732 + $0x2c] sm:$0xf]
        %v745 = vld [vmem:[%s732 + $0x30] sm:$0xf]
        %v746 = vld [vmem:[%s732 + $0x34] sm:$0xf]
        %v747 = vld [vmem:[%s732 + $0x38] sm:$0xf]
        %v748 = vld [vmem:[%s732 + $0x3c] sm:$0xf]
        %s749 = scalar_lea.vmem %s416, 1 [#allocation10]
        %v750 = vld [vmem:[%s749] sm:$0x1]
        %v752 = vperm.slane %v750, 0
        %v770 = vunpack.c.l.b16 %v733
        %v771 = vunpack.c.l.b16 %v734
        %v772 = vunpack.c.l.b16 %v735
        %v773 = vunpack.c.l.b16 %v736
        %v774 = vunpack.c.l.b16 %v737
        %v775 = vunpack.c.l.b16 %v738
        %v776 = vunpack.c.l.b16 %v739
        %v777 = vunpack.c.l.b16 %v740
        %v778 = vunpack.c.l.b16 %v741
        %v779 = vunpack.c.l.b16 %v742
        %v780 = vunpack.c.l.b16 %v743
        %v781 = vunpack.c.l.b16 %v744
        %v782 = vunpack.c.l.b16 %v745
        %v783 = vunpack.c.l.b16 %v746
        %v784 = vunpack.c.l.b16 %v747
        %v785 = vunpack.c.l.b16 %v748
        %v786 = vpack.c.b16 %v771, %v770
        %v787 = vpack.c.b16 %v773, %v772
        %v788 = vpack.c.b16 %v775, %v774
        %v789 = vpack.c.b16 %v777, %v776
        %v790 = vpack.c.b16 %v779, %v778
        %v791 = vpack.c.b16 %v781, %v780
        %v792 = vpack.c.b16 %v783, %v782
        %v793 = vpack.c.b16 %v785, %v784
        %802 = vmatpush.bf16.msra.mxu0 %v793
        %803 = vmatpush.bf16.msra.mxu0 %v792
        %804 = vmatpush.bf16.msra.mxu0 %v791
        %805 = vmatpush.bf16.msra.mxu0 %v790
        %806 = vmatpush.bf16.msra.mxu0 %v789
        %807 = vmatpush.bf16.msra.mxu0 %v788
        %808 = vmatpush.bf16.msra.mxu0 %v787
        %809 = vmatpush.bf16.msra.mxu0 %v786
        %810 = vmatmul.bf16.gmra.mxu0 %v731
        %v811 = vpop.f32.mrf.mxu0
        %v812 = vadd.f32 %v752, %v811
        %v813 = vpop.f32.mrf.mxu0
        %814 = vdwg.mxu0
        %v815 = vsel %vm636, %v812, -1e+30
        %816 = vmax.xlane.f32.xlu0 %v815
        %v817 = vpop.xlane.xlu0 %816
        %v818 = vsub.f32 %v815, %v817
        %v819 = vmul.f32 %v818, 1.442695
        %v820 = vpow.pop %v819
        %821 = vadd.xlane.f32.xlu0 %v820
        %v822 = vpop.xlane.xlu0 %821
        %v823 = vrcp.pop %v822
        %v824 = vmul.f32 %v820, %v823
        %v825 = vadd.f32 %v646, %v824
        %p826 = scmp.eq.s32.totalorder %s32, 0
        // Predicated region
        $region73: #{tpu_custom_call.1} parent=47 // pred_check
          %p827 = pneg %p826
        $region74: #{tpu_custom_call.1} parent=47 // pred_check_branch
          %829 = sbr.rel (%p827) target = $region76
        $region75: #{tpu_custom_call.1} parent=47 // pred_region
          %830 = vst [vmem:[#allocation13] sm:$0xff] %v825
        $region76: #{tpu_custom_call.1} parent=47 // pred_fallthru
          _
        %p831 = scmp.gt.s32.totalorder %s32, 0
        // Predicated region
        $region77: #{tpu_custom_call.1} parent=47 // pred_check
          %p832 = pneg %p831
        $region78: #{tpu_custom_call.1} parent=47 // pred_check_branch
          %834 = sbr.rel (%p832) target = $region80
        $region79: #{tpu_custom_call.1} parent=47 // pred_region
          %v835 = vld [vmem:[#allocation13] sm:$0xff]
          %v836 = vadd.f32 %v835, %v825
          %837 = vst [vmem:[#allocation13] sm:$0xff] %v836
        $region80: #{tpu_custom_call.1} parent=47 // pred_fallthru
          _
        %p838 = scmp.eq.s32.totalorder %s32, 1
        // Predicated region
        $region81: #{tpu_custom_call.1} parent=47 // pred_check
          %p839 = pneg %p838
        $region82: #{tpu_custom_call.1} parent=47 // pred_check_branch
          %841 = sbr.rel (%p839) target = $region84
        $region83: #{tpu_custom_call.1} parent=47 // pred_region
          %v842 = vld [vmem:[#allocation13] sm:$0xff]
          %v843 = vmul.f32 %v842, 0.25
          %v844 = vld [vmem:[#allocation11] sm:$0xff]
          %v845 = vld [vmem:[#allocation11 + $0x8] sm:$0xff]
          %v846 = vld [vmem:[#allocation11 + $0x10] sm:$0xff]
          %v847 = vld [vmem:[#allocation11 + $0x18] sm:$0xff]
          %v848 = vld [vmem:[#allocation11 + $0x20] sm:$0xff]
          %v849 = vld [vmem:[#allocation11 + $0x28] sm:$0xff]
          %v850 = vld [vmem:[#allocation11 + $0x30] sm:$0xff]
          %v851 = vld [vmem:[#allocation11 + $0x38] sm:$0xff]
          %v852 = vld [vmem:[#allocation11 + $0x40] sm:$0xff]
          %v853 = vld [vmem:[#allocation11 + $0x48] sm:$0xff]
          %v854 = vld [vmem:[#allocation11 + $0x50] sm:$0xff]
          %v855 = vld [vmem:[#allocation11 + $0x58] sm:$0xff]
          %v856 = vld [vmem:[#allocation11 + $0x60] sm:$0xff]
          %v857 = vld [vmem:[#allocation11 + $0x68] sm:$0xff]
          %v858 = vld [vmem:[#allocation11 + $0x70] sm:$0xff]
          %v859 = vld [vmem:[#allocation11 + $0x78] sm:$0xff]
          %v860 = vld [vmem:[%s6] sm:$0x1]
          %v862 = vperm.slane %v860, 0
          %864 = vmatpush.msra.mxu0 %v859
          %865 = vmatpush.msra.mxu0 %v858
          %866 = vmatpush.msra.mxu0 %v857
          %867 = vmatpush.msra.mxu0 %v856
          %868 = vmatpush.msra.mxu0 %v855
          %869 = vmatpush.msra.mxu0 %v854
          %870 = vmatpush.msra.mxu0 %v853
          %871 = vmatpush.msra.mxu0 %v852
          %872 = vmatpush.msra.mxu0 %v851
          %873 = vmatpush.msra.mxu0 %v850
          %874 = vmatpush.msra.mxu0 %v849
          %875 = vmatpush.msra.mxu0 %v848
          %876 = vmatpush.msra.mxu0 %v847
          %877 = vmatpush.msra.mxu0 %v846
          %878 = vmatpush.msra.mxu0 %v845
          %879 = vmatpush.msra.mxu0 %v844
          %880 = vmatmul.f32.gmra.mxu0 %v843
          %v881 = vpop.f32.mrf.mxu0
          %v882 = vadd.f32 %v862, %v881
          %883 = vdwg.mxu0
          %884 = vst [vmem:[#allocation13] sm:$0xff] %v882
        $region84: #{tpu_custom_call.1} parent=47 // pred_fallthru
          _
        // Predicated region
        $region85: #{tpu_custom_call.1} parent=47 // pred_check
          %p885 = pneg %p229
        $region86: #{tpu_custom_call.1} parent=47 // pred_check_branch
          %887 = sbr.rel (%p885) target = $region88
        $region87: #{tpu_custom_call.1} parent=47 // pred_region
          %889 = vsyncadd [#allocation4], 0
          %s890 = smul.addr %s31, 8
          %s891 = scalar_lea.hbm %s7, %s890
          %s893 = sshll.u32 [#allocation13], 4
          %s894 = int_to_ptr.vmem [resolvable:$true] %s893
          %s895 = sshll.u32 %s891, 4
          %s896 = int_to_ptr.hbm [resolvable:$true] %s895
          %898 = dma.vmem_to_hbm [thread:$0]  %s894, 128, %s896, [#allocation4]
        $region88: #{tpu_custom_call.1} parent=47 // pred_fallthru
          _
        // Predicated region
        $region89: #{tpu_custom_call.1} parent=47 // pred_check
          %p899 = pneg %p229
        $region90: #{tpu_custom_call.1} parent=47 // pred_check_branch
          %901 = sbr.rel (%p899) target = $region92
        $region91: #{tpu_custom_call.1} parent=47 // pred_region
          %903 = dma.done [#allocation4], 128
        $region92: #{tpu_custom_call.1} parent=47 // pred_fallthru
          _
      $region48: #{tpu_custom_call.1} parent=5 // pred_fallthru
        _
      %p904 = scmp.le.s32.totalorder 2, %s22
      // Predicated region
      $region93: #{tpu_custom_call.1} parent=5 // pred_check
        %p905 = pneg %p904
      $region94: #{tpu_custom_call.1} parent=5 // pred_check_branch
        %907 = sbr.rel (%p905) target = $region96
      $region95: #{tpu_custom_call.1} parent=5 // pred_region
        %s908 = ssub.s32 %s22, 2
      $region96: #{tpu_custom_call.1} parent=5 // pred_fallthru
        _
    $region6: #{tpu_custom_call.1} parent=1 // loop_footer
      %s26 = sadd.s32 1, %s22
    $region7: #{tpu_custom_call.1} parent=1 // loop_footer_branch
      %21 = sbr.rel target = $region3
    $region8: #{tpu_custom_call.1} parent=1 // loop_exit
      _
    %909 = vsyncpa [#allocation3], 1
    %s910 = scalar_lea.sflag [#allocation3], 1
    %911 = vsyncpa %s910, 1
    %912 = vsyncpa [#allocation6], 1
    %s913 = scalar_lea.sflag [#allocation6], 1
    %914 = vsyncpa %s913, 1
    %915 = vsyncpa [#allocation9], 1
    %s916 = scalar_lea.sflag [#allocation9], 1
    %917 = vsyncpa %s916, 1
    %918 = vsyncpa [#allocation12], 1
    %919 = vsyncpa [#allocation4], 1
    %s920 = scalar_lea.sflag [#allocation4], 1
    %921 = vsyncpa %s920, 1

</llo_original>
